<compile_context>
chip_gen: v5e
topology: v5e:2x2
jax: 0.10.0
libtpu: 0.0.40
codegen_flags: <defaults>
</compile_context>

<pallas_src>
import jax
import jax.numpy as jnp
import numpy as np
from jax.experimental import pallas as pl
from jax.experimental.pallas import tpu as pltpu


def _round_up(x, m):
    return (x + m - 1) // m * m


# ----------------------------------------------------------------------------
# Pallas kernel: fused encoder-matmul + ReLU + predictor + tanh + head matmul.
# ----------------------------------------------------------------------------
def _epoch_encoder_kernel(p_ref, wenc_ref, benc_ref, wpred_ref, bpred_ref,
                          whead_ref, bhead_ref, o_ref):
    patches = p_ref[...]                                              # (tm, C*k) bf16

    # encoder: Conv1d (as matmul over im2col patches) + ReLU   (bf16 MXU, f32 acc)
    h = jnp.dot(patches, wenc_ref[...],
                preferred_element_type=jnp.float32) + benc_ref[...]   # (tm, enc_p) f32
    h = jnp.maximum(h, 0.0)

    # predictor: per-timestep projection to model_dim + tanh
    p = jnp.dot(h.astype(jnp.bfloat16), wpred_ref[...],
                preferred_element_type=jnp.float32) + bpred_ref[...]  # (tm, mod_p) f32
    p = jnp.tanh(p)

    # head: per-timestep linear (lane-dense 128-wide store)
    o_ref[...] = (jnp.dot(p.astype(jnp.bfloat16), whead_ref[...],
                          preferred_element_type=jnp.float32)
                  + bhead_ref[...])                                   # (tm, head_p) f32


def _fused_mlp_pallas(patches, params, *, tm=512):
    """patches: (rows, C*k) bf16 -> (rows, head_dim) f32 via the Pallas kernel."""
    rows, ck = patches.shape
    w_enc, b_enc, w_pred, b_pred, w_head, b_head = params
    enc_dim = w_enc.shape[1]
    model_dim = w_pred.shape[1]
    head_dim = w_head.shape[1]

    # Pad all lane dims to multiples of 128: unmasked MXU slabs, lane-dense stores.
    enc_p = _round_up(enc_dim, 128)
    mod_p = _round_up(model_dim, 128)
    head_p = _round_up(head_dim, 128)

    def pad2(a, r, c, dtype):
        return jnp.pad(a, ((0, r - a.shape[0]), (0, c - a.shape[1]))).astype(dtype)

    w_enc_p = pad2(w_enc, ck, enc_p, jnp.bfloat16)
    b_enc_p = pad2(b_enc, 1, enc_p, jnp.float32)
    w_pred_p = pad2(w_pred, enc_p, mod_p, jnp.bfloat16)
    b_pred_p = pad2(b_pred, 1, mod_p, jnp.float32)
    w_head_p = pad2(w_head, mod_p, head_p, jnp.bfloat16)
    b_head_p = pad2(b_head, 1, head_p, jnp.float32)

    # Large row tile (256-512 sweet spot); clamp for tiny inputs and pad rows
    # to a tile multiple instead of asserting divisibility.
    tm = max(16, min(tm, _round_up(rows, 16)))
    rows_p = _round_up(rows, tm)
    if rows_p != rows:
        patches = jnp.pad(patches, ((0, rows_p - rows), (0, 0)))

    full = lambda i: (0, 0)  # weights/biases: one full-array block, resident across steps

    out = pl.pallas_call(
        _epoch_encoder_kernel,
        out_shape=jax.ShapeDtypeStruct((rows_p, head_p), jnp.float32),
        grid_spec=pltpu.PrefetchScalarGridSpec(
            num_scalar_prefetch=0,
            grid=(rows_p // tm,),
            in_specs=[
                pl.BlockSpec((tm, ck), lambda i: (i, 0)),
                pl.BlockSpec((ck, enc_p), full),
                pl.BlockSpec((1, enc_p), full),
                pl.BlockSpec((enc_p, mod_p), full),
                pl.BlockSpec((1, mod_p), full),
                pl.BlockSpec((mod_p, head_p), full),
                pl.BlockSpec((1, head_p), full),
            ],
            out_specs=pl.BlockSpec((tm, head_p), lambda i: (i, 0)),
        ),
        compiler_params=pltpu.CompilerParams(
            dimension_semantics=("parallel",),
            vmem_limit_bytes=32 * 1024 * 1024),
    )(patches, w_enc_p, b_enc_p, w_pred_p, b_pred_p, w_head_p, b_head_p)

    return out[:rows, :head_dim]


# ----------------------------------------------------------------------------
# Wrapper: EpochEncoder.forward semantics (epoch slicing + sub-module stack).
# ----------------------------------------------------------------------------
def epoch_encoder_forward(x, params, *, epoch_length, epoch_stride,
                          conv_kernel, conv_stride, tm=512):
    """x: (bs, channels, seq) or (bs, channels, freq, seq).  Returns
    (bs, epochs*enc_seq, head_dim), matching x.view(bs, -1, x.shape[-1])."""
    # spectrogram flattening (input.view(bs, -1, seq))
    if x.ndim == 4:
        x = x.reshape(x.shape[0], -1, x.shape[-1])
    bs, chans, seq = x.shape

    stride = epoch_length if epoch_stride == 0 else epoch_stride
    epochs = 1 + (seq - epoch_length) // stride
    enc_seq = 1 + (epoch_length - conv_kernel) // conv_stride
    n = bs * epochs
    ck = chans * conv_kernel

    if epoch_length == stride and conv_kernel == conv_stride:
        # Fully non-overlapping: epoch split + im2col is a single layout
        # transform -- no data duplication, no extra HBM round trip.
        xw = x[:, :, :epochs * epoch_length].reshape(bs, chans, epochs, epoch_length)
        xw = xw[..., :enc_seq * conv_kernel].reshape(
            bs, chans, epochs, enc_seq, conv_kernel)
        patches = jnp.transpose(xw, (0, 2, 3, 1, 4)).reshape(n * enc_seq, ck)
    else:
        # epoch split (mirrors the torch view/permute vs. stack branches)
        if epoch_length == stride:
            xe = x[:, :, :epoch_length + (epochs - 1) * stride]
            xe = xe.reshape(bs, chans, epochs, epoch_length)
            xe = jnp.transpose(xe, (0, 2, 1, 3)).reshape(n, chans, epoch_length)
        else:
            xe = jnp.stack(
                [x[:, :, i * stride:i * stride + epoch_length] for i in range(epochs)],
                axis=1).reshape(n, chans, epoch_length)
        # im2col for the encoder conv
        if conv_kernel == conv_stride:
            xw = xe[..., :enc_seq * conv_kernel].reshape(n, chans, enc_seq, conv_kernel)
            patches = jnp.transpose(xw, (0, 2, 1, 3)).reshape(n * enc_seq, ck)
        else:
            # TODO(synk): overlapping conv windows still duplicate data via stack;
            # could be moved into the kernel with a pl.ds/index_map over time.
            patches = jnp.stack(
                [xe[..., t * conv_stride:t * conv_stride + conv_kernel]
                 for t in range(enc_seq)], axis=1).reshape(n * enc_seq, ck)

    patches = patches.astype(jnp.bfloat16)                  # halve HBM read; MXU-native
    out_rows = _fused_mlp_pallas(patches, params, tm=tm)    # (N*enc_seq, head_dim) f32
    return out_rows.reshape(bs, -1, out_rows.shape[-1])     # (bs, epochs*enc_seq, D)


if __name__ == "__main__":
    # small shapes consistent with the module's forward (spectrogram input)
    bs, channels, freq, seq = 2, 4, 4, 256
    epoch_length, epoch_stride = 64, 0           # stride = 64 -> epochs = 4
    conv_kernel, conv_stride = 8, 8              # enc_seq = 8
    enc_dim, model_dim, head_dim = 32, 32, 16

    key = jax.random.PRNGKey(0)
    kx, k1, k2, k3, k4, k5, k6 = jax.random.split(key, 7)

    x = jax.random.normal(kx, (bs, channels, freq, seq), dtype=jnp.float32)

    chans = channels * freq
    ck = chans * conv_kernel                     # 128 -> lane-dense patches
    params = (
        0.1 * jax.random.normal(k1, (ck, enc_dim), jnp.float32),         # W_enc (conv (out,in,k) reshaped/T)
        0.1 * jax.random.normal(k2, (1, enc_dim), jnp.float32),          # b_enc
        0.1 * jax.random.normal(k3, (enc_dim, model_dim), jnp.float32),  # W_pred
        0.1 * jax.random.normal(k4, (1, model_dim), jnp.float32),        # b_pred
        0.1 * jax.random.normal(k5, (model_dim, head_dim), jnp.float32), # W_head
        0.1 * jax.random.normal(k6, (1, head_dim), jnp.float32),         # b_head
    )

    out = epoch_encoder_forward(
        x, params,
        epoch_length=epoch_length, epoch_stride=epoch_stride,
        conv_kernel=conv_kernel, conv_stride=conv_stride)
    out = jax.block_until_ready(out)

    # shape check against EpochEncoder semantics
    stride = epoch_length if epoch_stride == 0 else epoch_stride
    epochs = 1 + (seq - epoch_length) // stride
    enc_seq = 1 + (epoch_length - conv_kernel) // conv_stride
    assert out.shape == (bs, epochs * enc_seq, head_dim), out.shape

    # numerical check against a pure-numpy f32 reference
    xf = np.asarray(x).reshape(bs, chans, seq)
    xe = xf[:, :, :epochs * epoch_length].reshape(bs, chans, epochs, epoch_length)
    xe = xe.transpose(0, 2, 1, 3).reshape(bs * epochs, chans, epoch_length)
    patches = xe[..., :enc_seq * conv_kernel].reshape(
        bs * epochs, chans, enc_seq, conv_kernel)
    patches = patches.transpose(0, 2, 1, 3).reshape(bs * epochs * enc_seq, ck)
    w_enc, b_enc, w_pred, b_pred, w_head, b_head = (np.asarray(p) for p in params)
    h = np.maximum(patches @ w_enc + b_enc, 0.0)
    p = np.tanh(h @ w_pred + b_pred)
    ref = (p @ w_head + b_head).reshape(bs, -1, head_dim)
    # bf16 matmul inputs -> looser tolerance than the pure-f32 path
    np.testing.assert_allclose(np.asarray(out), ref, rtol=3e-2, atol=3e-2)

    print("KERNEL_OK")
</pallas_src>

<mosaic_0001>
module attributes {stable_mosaic.version = 11 : i64} {
  func.func @_epoch_encoder_kernel(%arg0: i32, %arg1: memref<64x128xbf16, #tpu.memory_space<vmem>>, %arg2: memref<128x128xbf16, #tpu.memory_space<vmem>>, %arg3: memref<1x128xf32, #tpu.memory_space<vmem>>, %arg4: memref<128x128xbf16, #tpu.memory_space<vmem>>, %arg5: memref<1x128xf32, #tpu.memory_space<vmem>>, %arg6: memref<128x128xbf16, #tpu.memory_space<vmem>>, %arg7: memref<1x128xf32, #tpu.memory_space<vmem>>, %arg8: memref<64x128xf32, #tpu.memory_space<vmem>>) attributes {dimension_semantics = [#tpu.dimension_semantics<parallel>], iteration_bounds = array<i64: 1>, scalar_prefetch = 0 : i64, scratch_operands = 0 : i64, tpu.core_type = #tpu.core_type<tc>, window_params = [{transform_indices = @transform_0, window_bounds = array<i64: 64, 128>}, {pipeline_mode = #tpu.pipeline_mode<synchronous>, transform_indices = @transform_1, window_bounds = array<i64: 128, 128>}, {pipeline_mode = #tpu.pipeline_mode<synchronous>, transform_indices = @transform_2, window_bounds = array<i64: 1, 128>}, {pipeline_mode = #tpu.pipeline_mode<synchronous>, transform_indices = @transform_3, window_bounds = array<i64: 128, 128>}, {pipeline_mode = #tpu.pipeline_mode<synchronous>, transform_indices = @transform_4, window_bounds = array<i64: 1, 128>}, {pipeline_mode = #tpu.pipeline_mode<synchronous>, transform_indices = @transform_5, window_bounds = array<i64: 128, 128>}, {pipeline_mode = #tpu.pipeline_mode<synchronous>, transform_indices = @transform_6, window_bounds = array<i64: 1, 128>}, {transform_indices = @transform_7, window_bounds = array<i64: 64, 128>}]} {
    %c0 = arith.constant 0 : index
    %c0_0 = arith.constant 0 : index
    %0 = vector.load %arg1[%c0, %c0_0] : memref<64x128xbf16, #tpu.memory_space<vmem>>, vector<64x128xbf16>
    %c0_1 = arith.constant 0 : index
    %c0_2 = arith.constant 0 : index
    %1 = vector.load %arg2[%c0_1, %c0_2] : memref<128x128xbf16, #tpu.memory_space<vmem>>, vector<128x128xbf16>
    %cst = arith.constant dense<0.000000e+00> : vector<64x128xf32>
    %2 = tpu.matmul %0, %1, %cst {dimension_numbers = #tpu.dot_dimension_numbers<[1], [0], [0], [1], [0, 0, 1, 1], [], []>} : vector<64x128xbf16>, vector<128x128xbf16>, vector<64x128xf32> -> vector<64x128xf32>
    %c0_3 = arith.constant 0 : index
    %c0_4 = arith.constant 0 : index
    %3 = vector.load %arg3[%c0_3, %c0_4] : memref<1x128xf32, #tpu.memory_space<vmem>>, vector<1x128xf32>
    %4 = vector.broadcast %3 : vector<1x128xf32> to vector<64x128xf32>
    %5 = arith.addf %2, %4 : vector<64x128xf32>
    %cst_5 = arith.constant 0.000000e+00 : f32
    %6 = vector.broadcast %cst_5 : f32 to vector<64x128xf32>
    %7 = arith.maximumf %5, %6 : vector<64x128xf32>
    %8 = arith.truncf %7 : vector<64x128xf32> to vector<64x128xbf16>
    %c0_6 = arith.constant 0 : index
    %c0_7 = arith.constant 0 : index
    %9 = vector.load %arg4[%c0_6, %c0_7] : memref<128x128xbf16, #tpu.memory_space<vmem>>, vector<128x128xbf16>
    %cst_8 = arith.constant dense<0.000000e+00> : vector<64x128xf32>
    %10 = tpu.matmul %8, %9, %cst_8 {dimension_numbers = #tpu.dot_dimension_numbers<[1], [0], [0], [1], [0, 0, 1, 1], [], []>} : vector<64x128xbf16>, vector<128x128xbf16>, vector<64x128xf32> -> vector<64x128xf32>
    %c0_9 = arith.constant 0 : index
    %c0_10 = arith.constant 0 : index
    %11 = vector.load %arg5[%c0_9, %c0_10] : memref<1x128xf32, #tpu.memory_space<vmem>>, vector<1x128xf32>
    %12 = vector.broadcast %11 : vector<1x128xf32> to vector<64x128xf32>
    %13 = arith.addf %10, %12 : vector<64x128xf32>
    %14 = math.tanh %13 : vector<64x128xf32>
    %15 = arith.truncf %14 : vector<64x128xf32> to vector<64x128xbf16>
    %c0_11 = arith.constant 0 : index
    %c0_12 = arith.constant 0 : index
    %16 = vector.load %arg6[%c0_11, %c0_12] : memref<128x128xbf16, #tpu.memory_space<vmem>>, vector<128x128xbf16>
    %cst_13 = arith.constant dense<0.000000e+00> : vector<64x128xf32>
    %17 = tpu.matmul %15, %16, %cst_13 {dimension_numbers = #tpu.dot_dimension_numbers<[1], [0], [0], [1], [0, 0, 1, 1], [], []>} : vector<64x128xbf16>, vector<128x128xbf16>, vector<64x128xf32> -> vector<64x128xf32>
    %c0_14 = arith.constant 0 : index
    %c0_15 = arith.constant 0 : index
    %18 = vector.load %arg7[%c0_14, %c0_15] : memref<1x128xf32, #tpu.memory_space<vmem>>, vector<1x128xf32>
    %19 = vector.broadcast %18 : vector<1x128xf32> to vector<64x128xf32>
    %20 = arith.addf %17, %19 : vector<64x128xf32>
    %c0_16 = arith.constant 0 : index
    %c0_17 = arith.constant 0 : index
    %21 = vector.load %arg8[%c0_16, %c0_17] : memref<64x128xf32, #tpu.memory_space<vmem>>, vector<64x128xf32>
    tpu.vector_store %arg8[%c0_16, %c0_17], %20 {strides = array<i32>} : memref<64x128xf32, #tpu.memory_space<vmem>>, vector<64x128xf32>,
    return
  }
  func.func @transform_0(%arg0: i32) -> (i32, i32) {
    %c0_i32 = arith.constant 0 : i32
    %c0_i32_0 = arith.constant 0 : i32
    return %arg0, %c0_i32 : i32, i32
  }
  func.func @transform_1(%arg0: i32) -> (i32, i32) {
    %c0_i32 = arith.constant 0 : i32
    %c0_i32_0 = arith.constant 0 : i32
    %c0_i32_1 = arith.constant 0 : i32
    return %c0_i32, %c0_i32_0 : i32, i32
  }
  func.func @transform_2(%arg0: i32) -> (i32, i32) {
    %c0_i32 = arith.constant 0 : i32
    %c0_i32_0 = arith.constant 0 : i32
    %c0_i32_1 = arith.constant 0 : i32
    return %c0_i32, %c0_i32_0 : i32, i32
  }
  func.func @transform_3(%arg0: i32) -> (i32, i32) {
    %c0_i32 = arith.constant 0 : i32
    %c0_i32_0 = arith.constant 0 : i32
    %c0_i32_1 = arith.constant 0 : i32
    return %c0_i32, %c0_i32_0 : i32, i32
  }
  func.func @transform_4(%arg0: i32) -> (i32, i32) {
    %c0_i32 = arith.constant 0 : i32
    %c0_i32_0 = arith.constant 0 : i32
    %c0_i32_1 = arith.constant 0 : i32
    return %c0_i32, %c0_i32_0 : i32, i32
  }
  func.func @transform_5(%arg0: i32) -> (i32, i32) {
    %c0_i32 = arith.constant 0 : i32
    %c0_i32_0 = arith.constant 0 : i32
    %c0_i32_1 = arith.constant 0 : i32
    return %c0_i32, %c0_i32_0 : i32, i32
  }
  func.func @transform_6(%arg0: i32) -> (i32, i32) {
    %c0_i32 = arith.constant 0 : i32
    %c0_i32_0 = arith.constant 0 : i32
    %c0_i32_1 = arith.constant 0 : i32
    return %c0_i32, %c0_i32_0 : i32, i32
  }
  func.func @transform_7(%arg0: i32) -> (i32, i32) {
    %c0_i32 = arith.constant 0 : i32
    %c0_i32_0 = arith.constant 0 : i32
    return %arg0, %c0_i32 : i32, i32
  }
}

</mosaic_0001>

<llo_original>
// kernel: tpu_custom_call.1
$region0: #{tpu_custom_call.1}
  #allocation0 [shape = 'u32[]', space=smem, size = 0x4, offset = 0x4, fixed_abs, tag = 'smem constant byte address 0x4 - core index']
  #allocation1 [shape = 'u32[72,128]{1,0:T(1,128)}', space=vmem, size = 0x9000, scoped, tag = 'internal scratch']
  %s0 = inlined_call_operand.hbm [shape: bf16[64,128], index: 0, kind: input, shape index: {}]
  %s1 = inlined_call_operand.hbm [shape: bf16[128,128], index: 1, kind: input, shape index: {}]
  %s2 = inlined_call_operand.vmem [shape: f32[1,128], index: 2, kind: input, shape index: {}]
  %s3 = inlined_call_operand.hbm [shape: bf16[128,128], index: 3, kind: input, shape index: {}]
  %s4 = inlined_call_operand.vmem [shape: f32[1,128], index: 4, kind: input, shape index: {}]
  %s5 = inlined_call_operand.hbm [shape: bf16[128,128], index: 5, kind: input, shape index: {}]
  %s6 = inlined_call_operand.vmem [shape: f32[1,128], index: 6, kind: input, shape index: {}]
  %s7 = inlined_call_operand.hbm [shape: f32[64,128], index: 7, kind: output, shape index: {}]
  %s8 = sld [smem:[#allocation0]]
  $region54: #{tpu_custom_call.1} parent=0
    _
  %s10 = ssub.s32 1, %s8
  %s11 = scalar_select 0, %s10, %s8
  $region1: #{tpu_custom_call.1} parent=0
    #allocation2 [shape = 'u8[16384]{0}', space=vmem, size = 0x4000, scoped, tag = 'input window, operand 0, single buffered']
    #allocation3 [shape = 's32[1]{0}', space=sflag, size = 0x4, scoped, tag = 'scoped memory for tpu_custom_call.1']
    #allocation4 [shape = 's32[1]{0}', space=sflag, size = 0x4, scoped, tag = 'scoped memory for tpu_custom_call.1']
    #allocation5 [shape = 'u8[32768]{0}', space=vmem, size = 0x8000, scoped, tag = 'input window, operand 1, single buffered']
    #allocation6 [shape = 's32[1]{0}', space=sflag, size = 0x4, scoped, tag = 'scoped memory for tpu_custom_call.1']
    #allocation7 [shape = 'u8[32768]{0}', space=vmem, size = 0x8000, scoped, tag = 'input window, operand 3, single buffered']
    #allocation8 [shape = 'u8[32768]{0}', space=vmem, size = 0x8000, scoped, tag = 'input window, operand 5, single buffered']
    #allocation9 [shape = 's32[1]{0}', space=sflag, size = 0x4, scoped, tag = 'scoped memory for tpu_custom_call.1']
    #allocation10 [shape = 'u8[32768]{0}', space=vmem, size = 0x8000, scoped, tag = 'output window, operand 0, single buffered']
    %12 = vsyncpa [#allocation3], 0
    %13 = vsyncpa [#allocation6], 0
    %14 = vsyncpa [#allocation9], 0
    %15 = vsyncpa [#allocation4], 0
    // Predicated region
    $region2: #{tpu_custom_call.1} parent=1 // pred_check
      _
    $region3: #{tpu_custom_call.1} parent=1 // pred_check_branch
      %17 = sbr.rel (0) target = $region5
    $region4: #{tpu_custom_call.1} parent=1 // pred_region
      %19 = vsyncadd [#allocation3], 0
      %s20 = sshll.u32 %s0, 4
      %s21 = int_to_ptr.hbm [resolvable:$true] %s20
      %s22 = sshll.u32 [#allocation2], 4
      %s23 = int_to_ptr.vmem [resolvable:$true] %s22
      %28 = dma.hbm_to_vmem [thread:$0]  %s21, 512, %s23, [#allocation3], 64, 64, 4
    $region5: #{tpu_custom_call.1} parent=1 // pred_fallthru
      _
    // Predicated region
    $region6: #{tpu_custom_call.1} parent=1 // pred_check
      _
    $region7: #{tpu_custom_call.1} parent=1 // pred_check_branch
      %30 = sbr.rel (0) target = $region9
    $region8: #{tpu_custom_call.1} parent=1 // pred_region
      %32 = vsyncadd [#allocation6], 0
      %s33 = sshll.u32 %s1, 4
      %s34 = int_to_ptr.hbm [resolvable:$true] %s33
      %s35 = sshll.u32 [#allocation5], 4
      %s36 = int_to_ptr.vmem [resolvable:$true] %s35
      %41 = dma.hbm_to_vmem [thread:$0]  %s34, 1024, %s36, [#allocation6], 64, 64, 4
    $region9: #{tpu_custom_call.1} parent=1 // pred_fallthru
      _
    // Predicated region
    $region10: #{tpu_custom_call.1} parent=1 // pred_check
      _
    $region11: #{tpu_custom_call.1} parent=1 // pred_check_branch
      %43 = sbr.rel (0) target = $region13
    $region12: #{tpu_custom_call.1} parent=1 // pred_region
      _
    $region13: #{tpu_custom_call.1} parent=1 // pred_fallthru
      _
    // Predicated region
    $region14: #{tpu_custom_call.1} parent=1 // pred_check
      _
    $region15: #{tpu_custom_call.1} parent=1 // pred_check_branch
      %45 = sbr.rel (0) target = $region17
    $region16: #{tpu_custom_call.1} parent=1 // pred_region
      %47 = vsyncadd [#allocation6], 0
      %s48 = sshll.u32 %s3, 4
      %s49 = int_to_ptr.hbm [resolvable:$true] %s48
      %s50 = sshll.u32 [#allocation7], 4
      %s51 = int_to_ptr.vmem [resolvable:$true] %s50
      %56 = dma.hbm_to_vmem [thread:$0]  %s49, 1024, %s51, [#allocation6], 64, 64, 4
    $region17: #{tpu_custom_call.1} parent=1 // pred_fallthru
      _
    // Predicated region
    $region18: #{tpu_custom_call.1} parent=1 // pred_check
      _
    $region19: #{tpu_custom_call.1} parent=1 // pred_check_branch
      %58 = sbr.rel (0) target = $region21
    $region20: #{tpu_custom_call.1} parent=1 // pred_region
      _
    $region21: #{tpu_custom_call.1} parent=1 // pred_fallthru
      _
    // Predicated region
    $region22: #{tpu_custom_call.1} parent=1 // pred_check
      _
    $region23: #{tpu_custom_call.1} parent=1 // pred_check_branch
      %60 = sbr.rel (0) target = $region25
    $region24: #{tpu_custom_call.1} parent=1 // pred_region
      %62 = vsyncadd [#allocation9], 0
      %s63 = sshll.u32 %s5, 4
      %s64 = int_to_ptr.hbm [resolvable:$true] %s63
      %s65 = sshll.u32 [#allocation8], 4
      %s66 = int_to_ptr.vmem [resolvable:$true] %s65
      %71 = dma.hbm_to_vmem [thread:$0]  %s64, 1024, %s66, [#allocation9], 64, 64, 4
    $region25: #{tpu_custom_call.1} parent=1 // pred_fallthru
      _
    // Predicated region
    $region26: #{tpu_custom_call.1} parent=1 // pred_check
      _
    $region27: #{tpu_custom_call.1} parent=1 // pred_check_branch
      %73 = sbr.rel (0) target = $region29
    $region28: #{tpu_custom_call.1} parent=1 // pred_region
      _
    $region29: #{tpu_custom_call.1} parent=1 // pred_fallthru
      _
    // Predicated region
    $region30: #{tpu_custom_call.1} parent=1 // pred_check
      _
    $region31: #{tpu_custom_call.1} parent=1 // pred_check_branch
      %75 = sbr.rel (0) target = $region33
    $region32: #{tpu_custom_call.1} parent=1 // pred_region
      %77 = dma.done [#allocation3], 512
    $region33: #{tpu_custom_call.1} parent=1 // pred_fallthru
      _
    // Predicated region
    $region34: #{tpu_custom_call.1} parent=1 // pred_check
      _
    $region35: #{tpu_custom_call.1} parent=1 // pred_check_branch
      %79 = sbr.rel (0) target = $region37
    $region36: #{tpu_custom_call.1} parent=1 // pred_region
      %81 = dma.done [#allocation6], 1024
    $region37: #{tpu_custom_call.1} parent=1 // pred_fallthru
      _
    // Predicated region
    $region38: #{tpu_custom_call.1} parent=1 // pred_check
      _
    $region39: #{tpu_custom_call.1} parent=1 // pred_check_branch
      %83 = sbr.rel (0) target = $region41
    $region40: #{tpu_custom_call.1} parent=1 // pred_region
      %85 = dma.done [#allocation6], 1024
    $region41: #{tpu_custom_call.1} parent=1 // pred_fallthru
      _
    // Predicated region
    $region42: #{tpu_custom_call.1} parent=1 // pred_check
      _
    $region43: #{tpu_custom_call.1} parent=1 // pred_check_branch
      %87 = sbr.rel (0) target = $region45
    $region44: #{tpu_custom_call.1} parent=1 // pred_region
      %89 = dma.done [#allocation9], 1024
    $region45: #{tpu_custom_call.1} parent=1 // pred_fallthru
      _
    %v90 = vld [vmem:[#allocation2] sm:$0xf]
    %v91 = vld [vmem:[#allocation2 + $0x4] sm:$0xf]
    %v92 = vld [vmem:[#allocation2 + $0x8] sm:$0xf]
    %v93 = vld [vmem:[#allocation2 + $0xc] sm:$0xf]
    %v94 = vld [vmem:[#allocation2 + $0x10] sm:$0xf]
    %v95 = vld [vmem:[#allocation2 + $0x14] sm:$0xf]
    %v96 = vld [vmem:[#allocation2 + $0x18] sm:$0xf]
    %v97 = vld [vmem:[#allocation2 + $0x1c] sm:$0xf]
    %v98 = vld [vmem:[#allocation5] sm:$0xf]
    %v99 = vld [vmem:[#allocation5 + $0x4] sm:$0xf]
    %v100 = vld [vmem:[#allocation5 + $0x8] sm:$0xf]
    %v101 = vld [vmem:[#allocation5 + $0xc] sm:$0xf]
    %v102 = vld [vmem:[#allocation5 + $0x10] sm:$0xf]
    %v103 = vld [vmem:[#allocation5 + $0x14] sm:$0xf]
    %v104 = vld [vmem:[#allocation5 + $0x18] sm:$0xf]
    %v105 = vld [vmem:[#allocation5 + $0x1c] sm:$0xf]
    %v106 = vld [vmem:[#allocation5 + $0x20] sm:$0xf]
    %v107 = vld [vmem:[#allocation5 + $0x24] sm:$0xf]
    %v108 = vld [vmem:[#allocation5 + $0x28] sm:$0xf]
    %v109 = vld [vmem:[#allocation5 + $0x2c] sm:$0xf]
    %v110 = vld [vmem:[#allocation5 + $0x30] sm:$0xf]
    %v111 = vld [vmem:[#allocation5 + $0x34] sm:$0xf]
    %v112 = vld [vmem:[#allocation5 + $0x38] sm:$0xf]
    %v113 = vld [vmem:[#allocation5 + $0x3c] sm:$0xf]
    %v114 = vld [vmem:[%s2] sm:$0x1]
    %v116 = vperm.slane %v114, 0
    %v126 = vunpack.c.l.b16 %v90
    %v127 = vunpack.c.l.b16 %v91
    %v128 = vunpack.c.l.b16 %v92
    %v129 = vunpack.c.l.b16 %v93
    %v130 = vunpack.c.l.b16 %v94
    %v131 = vunpack.c.l.b16 %v95
    %v132 = vunpack.c.l.b16 %v96
    %v133 = vunpack.c.l.b16 %v97
    %v134 = vpack.c.b16 %v127, %v126
    %v135 = vpack.c.b16 %v129, %v128
    %v136 = vpack.c.b16 %v131, %v130
    %v137 = vpack.c.b16 %v133, %v132
    %v158 = vunpack.c.l.b16 %v98
    %v159 = vunpack.c.l.b16 %v99
    %v160 = vunpack.c.l.b16 %v100
    %v161 = vunpack.c.l.b16 %v101
    %v162 = vunpack.c.l.b16 %v102
    %v163 = vunpack.c.l.b16 %v103
    %v164 = vunpack.c.l.b16 %v104
    %v165 = vunpack.c.l.b16 %v105
    %v166 = vunpack.c.l.b16 %v106
    %v167 = vunpack.c.l.b16 %v107
    %v168 = vunpack.c.l.b16 %v108
    %v169 = vunpack.c.l.b16 %v109
    %v170 = vunpack.c.l.b16 %v110
    %v171 = vunpack.c.l.b16 %v111
    %v172 = vunpack.c.l.b16 %v112
    %v173 = vunpack.c.l.b16 %v113
    %v174 = vpack.c.b16 %v159, %v158
    %v175 = vpack.c.b16 %v161, %v160
    %v176 = vpack.c.b16 %v163, %v162
    %v177 = vpack.c.b16 %v165, %v164
    %v178 = vpack.c.b16 %v167, %v166
    %v179 = vpack.c.b16 %v169, %v168
    %v180 = vpack.c.b16 %v171, %v170
    %v181 = vpack.c.b16 %v173, %v172
    %190 = vmatpush.bf16.msra.mxu0 %v181
    %191 = vmatpush.bf16.msra.mxu0 %v180
    %192 = vmatpush.bf16.msra.mxu0 %v179
    %193 = vmatpush.bf16.msra.mxu0 %v178
    %194 = vmatpush.bf16.msra.mxu0 %v177
    %195 = vmatpush.bf16.msra.mxu0 %v176
    %196 = vmatpush.bf16.msra.mxu0 %v175
    %197 = vmatpush.bf16.msra.mxu0 %v174
    %198 = vmatmul.bf16.gmra.mxu0 %v134
    %v199 = vpop.f32.mrf.mxu0
    %v200 = vadd.f32 %v116, %v199
    %v201 = vpop.f32.mrf.mxu0
    %v202 = vadd.f32 %v116, %v201
    %203 = vmatmul.bf16.gmra.mxu0 %v135
    %v204 = vpop.f32.mrf.mxu0
    %v205 = vadd.f32 %v116, %v204
    %v206 = vpop.f32.mrf.mxu0
    %v207 = vadd.f32 %v116, %v206
    %208 = vmatmul.bf16.gmra.mxu0 %v136
    %v209 = vpop.f32.mrf.mxu0
    %v210 = vadd.f32 %v116, %v209
    %v211 = vpop.f32.mrf.mxu0
    %v212 = vadd.f32 %v116, %v211
    %213 = vmatmul.bf16.gmra.mxu0 %v137
    %v214 = vpop.f32.mrf.mxu0
    %v215 = vadd.f32 %v116, %v214
    %v216 = vpop.f32.mrf.mxu0
    %v217 = vadd.f32 %v116, %v216
    %218 = vdwg.mxu0
    %v219 = vmax.f32 %v200, 0.0
    %v220 = vmax.f32 %v202, 0.0
    %v221 = vmax.f32 %v205, 0.0
    %v222 = vmax.f32 %v207, 0.0
    %v223 = vmax.f32 %v210, 0.0
    %v224 = vmax.f32 %v212, 0.0
    %v225 = vmax.f32 %v215, 0.0
    %v226 = vmax.f32 %v217, 0.0
    %v227 = vpack.c.bf16 %v220, %v219
    %v228 = vpack.c.bf16 %v222, %v221
    %v229 = vpack.c.bf16 %v224, %v223
    %v230 = vpack.c.bf16 %v226, %v225
    %v231 = vld [vmem:[#allocation7] sm:$0xf]
    %v232 = vld [vmem:[#allocation7 + $0x4] sm:$0xf]
    %v233 = vld [vmem:[#allocation7 + $0x8] sm:$0xf]
    %v234 = vld [vmem:[#allocation7 + $0xc] sm:$0xf]
    %v235 = vld [vmem:[#allocation7 + $0x10] sm:$0xf]
    %v236 = vld [vmem:[#allocation7 + $0x14] sm:$0xf]
    %v237 = vld [vmem:[#allocation7 + $0x18] sm:$0xf]
    %v238 = vld [vmem:[#allocation7 + $0x1c] sm:$0xf]
    %v239 = vld [vmem:[#allocation7 + $0x20] sm:$0xf]
    %v240 = vld [vmem:[#allocation7 + $0x24] sm:$0xf]
    %v241 = vld [vmem:[#allocation7 + $0x28] sm:$0xf]
    %v242 = vld [vmem:[#allocation7 + $0x2c] sm:$0xf]
    %v243 = vld [vmem:[#allocation7 + $0x30] sm:$0xf]
    %v244 = vld [vmem:[#allocation7 + $0x34] sm:$0xf]
    %v245 = vld [vmem:[#allocation7 + $0x38] sm:$0xf]
    %v246 = vld [vmem:[#allocation7 + $0x3c] sm:$0xf]
    %v247 = vld [vmem:[%s4] sm:$0x1]
    %v249 = vperm.slane %v247, 0
    %v267 = vunpack.c.l.b16 %v231
    %v268 = vunpack.c.l.b16 %v232
    %v269 = vunpack.c.l.b16 %v233
    %v270 = vunpack.c.l.b16 %v234
    %v271 = vunpack.c.l.b16 %v235
    %v272 = vunpack.c.l.b16 %v236
    %v273 = vunpack.c.l.b16 %v237
    %v274 = vunpack.c.l.b16 %v238
    %v275 = vunpack.c.l.b16 %v239
    %v276 = vunpack.c.l.b16 %v240
    %v277 = vunpack.c.l.b16 %v241
    %v278 = vunpack.c.l.b16 %v242
    %v279 = vunpack.c.l.b16 %v243
    %v280 = vunpack.c.l.b16 %v244
    %v281 = vunpack.c.l.b16 %v245
    %v282 = vunpack.c.l.b16 %v246
    %v283 = vpack.c.b16 %v268, %v267
    %v284 = vpack.c.b16 %v270, %v269
    %v285 = vpack.c.b16 %v272, %v271
    %v286 = vpack.c.b16 %v274, %v273
    %v287 = vpack.c.b16 %v276, %v275
    %v288 = vpack.c.b16 %v278, %v277
    %v289 = vpack.c.b16 %v280, %v279
    %v290 = vpack.c.b16 %v282, %v281
    %299 = vmatpush.bf16.msra.mxu0 %v290
    %300 = vmatpush.bf16.msra.mxu0 %v289
    %301 = vmatpush.bf16.msra.mxu0 %v288
    %302 = vmatpush.bf16.msra.mxu0 %v287
    %303 = vmatpush.bf16.msra.mxu0 %v286
    %304 = vmatpush.bf16.msra.mxu0 %v285
    %305 = vmatpush.bf16.msra.mxu0 %v284
    %306 = vmatpush.bf16.msra.mxu0 %v283
    %307 = vmatmul.bf16.gmra.mxu0 %v227
    %v308 = vpop.f32.mrf.mxu0
    %v309 = vadd.f32 %v249, %v308
    %v310 = vpop.f32.mrf.mxu0
    %v311 = vadd.f32 %v249, %v310
    %312 = vmatmul.bf16.gmra.mxu0 %v228
    %v313 = vpop.f32.mrf.mxu0
    %v314 = vadd.f32 %v249, %v313
    %v315 = vpop.f32.mrf.mxu0
    %v316 = vadd.f32 %v249, %v315
    %317 = vmatmul.bf16.gmra.mxu0 %v229
    %v318 = vpop.f32.mrf.mxu0
    %v319 = vadd.f32 %v249, %v318
    %v320 = vpop.f32.mrf.mxu0
    %v321 = vadd.f32 %v249, %v320
    %322 = vmatmul.bf16.gmra.mxu0 %v230
    %v323 = vpop.f32.mrf.mxu0
    %v324 = vadd.f32 %v249, %v323
    %v325 = vpop.f32.mrf.mxu0
    %v326 = vadd.f32 %v249, %v325
    %327 = vdwg.mxu0
    %v328 = vtanh.pop %v309
    %v329 = vtanh.pop %v311
    %v330 = vtanh.pop %v314
    %v331 = vtanh.pop %v316
    %v332 = vtanh.pop %v319
    %v333 = vtanh.pop %v321
    %v334 = vtanh.pop %v324
    %v335 = vtanh.pop %v326
    %v336 = vpack.c.bf16 %v329, %v328
    %v337 = vpack.c.bf16 %v331, %v330
    %v338 = vpack.c.bf16 %v333, %v332
    %v339 = vpack.c.bf16 %v335, %v334
    %v340 = vld [vmem:[#allocation8] sm:$0xf]
    %v341 = vld [vmem:[#allocation8 + $0x4] sm:$0xf]
    %v342 = vld [vmem:[#allocation8 + $0x8] sm:$0xf]
    %v343 = vld [vmem:[#allocation8 + $0xc] sm:$0xf]
    %v344 = vld [vmem:[#allocation8 + $0x10] sm:$0xf]
    %v345 = vld [vmem:[#allocation8 + $0x14] sm:$0xf]
    %v346 = vld [vmem:[#allocation8 + $0x18] sm:$0xf]
    %v347 = vld [vmem:[#allocation8 + $0x1c] sm:$0xf]
    %v348 = vld [vmem:[#allocation8 + $0x20] sm:$0xf]
    %v349 = vld [vmem:[#allocation8 + $0x24] sm:$0xf]
    %v350 = vld [vmem:[#allocation8 + $0x28] sm:$0xf]
    %v351 = vld [vmem:[#allocation8 + $0x2c] sm:$0xf]
    %v352 = vld [vmem:[#allocation8 + $0x30] sm:$0xf]
    %v353 = vld [vmem:[#allocation8 + $0x34] sm:$0xf]
    %v354 = vld [vmem:[#allocation8 + $0x38] sm:$0xf]
    %v355 = vld [vmem:[#allocation8 + $0x3c] sm:$0xf]
    %v356 = vld [vmem:[%s6] sm:$0x1]
    %v358 = vperm.slane %v356, 0
    %v376 = vunpack.c.l.b16 %v340
    %v377 = vunpack.c.l.b16 %v341
    %v378 = vunpack.c.l.b16 %v342
    %v379 = vunpack.c.l.b16 %v343
    %v380 = vunpack.c.l.b16 %v344
    %v381 = vunpack.c.l.b16 %v345
    %v382 = vunpack.c.l.b16 %v346
    %v383 = vunpack.c.l.b16 %v347
    %v384 = vunpack.c.l.b16 %v348
    %v385 = vunpack.c.l.b16 %v349
    %v386 = vunpack.c.l.b16 %v350
    %v387 = vunpack.c.l.b16 %v351
    %v388 = vunpack.c.l.b16 %v352
    %v389 = vunpack.c.l.b16 %v353
    %v390 = vunpack.c.l.b16 %v354
    %v391 = vunpack.c.l.b16 %v355
    %v392 = vpack.c.b16 %v377, %v376
    %v393 = vpack.c.b16 %v379, %v378
    %v394 = vpack.c.b16 %v381, %v380
    %v395 = vpack.c.b16 %v383, %v382
    %v396 = vpack.c.b16 %v385, %v384
    %v397 = vpack.c.b16 %v387, %v386
    %v398 = vpack.c.b16 %v389, %v388
    %v399 = vpack.c.b16 %v391, %v390
    %408 = vmatpush.bf16.msra.mxu0 %v399
    %409 = vmatpush.bf16.msra.mxu0 %v398
    %410 = vmatpush.bf16.msra.mxu0 %v397
    %411 = vmatpush.bf16.msra.mxu0 %v396
    %412 = vmatpush.bf16.msra.mxu0 %v395
    %413 = vmatpush.bf16.msra.mxu0 %v394
    %414 = vmatpush.bf16.msra.mxu0 %v393
    %415 = vmatpush.bf16.msra.mxu0 %v392
    %416 = vmatmul.bf16.gmra.mxu0 %v336
    %v417 = vpop.f32.mrf.mxu0
    %v418 = vadd.f32 %v358, %v417
    %v419 = vpop.f32.mrf.mxu0
    %v420 = vadd.f32 %v358, %v419
    %421 = vmatmul.bf16.gmra.mxu0 %v337
    %v422 = vpop.f32.mrf.mxu0
    %v423 = vadd.f32 %v358, %v422
    %v424 = vpop.f32.mrf.mxu0
    %v425 = vadd.f32 %v358, %v424
    %426 = vmatmul.bf16.gmra.mxu0 %v338
    %v427 = vpop.f32.mrf.mxu0
    %v428 = vadd.f32 %v358, %v427
    %v429 = vpop.f32.mrf.mxu0
    %v430 = vadd.f32 %v358, %v429
    %431 = vmatmul.bf16.gmra.mxu0 %v339
    %v432 = vpop.f32.mrf.mxu0
    %v433 = vadd.f32 %v358, %v432
    %v434 = vpop.f32.mrf.mxu0
    %v435 = vadd.f32 %v358, %v434
    %436 = vdwg.mxu0
    %437 = vst [vmem:[#allocation10] sm:$0xff] %v418
    %438 = vst [vmem:[#allocation10 + $0x8] sm:$0xff] %v420
    %439 = vst [vmem:[#allocation10 + $0x10] sm:$0xff] %v423
    %440 = vst [vmem:[#allocation10 + $0x18] sm:$0xff] %v425
    %441 = vst [vmem:[#allocation10 + $0x20] sm:$0xff] %v428
    %442 = vst [vmem:[#allocation10 + $0x28] sm:$0xff] %v430
    %443 = vst [vmem:[#allocation10 + $0x30] sm:$0xff] %v433
    %444 = vst [vmem:[#allocation10 + $0x38] sm:$0xff] %v435
    // Predicated region
    $region46: #{tpu_custom_call.1} parent=1 // pred_check
      _
    $region47: #{tpu_custom_call.1} parent=1 // pred_check_branch
      %446 = sbr.rel (0) target = $region49
    $region48: #{tpu_custom_call.1} parent=1 // pred_region
      %448 = vsyncadd [#allocation4], 0
      %s449 = sshll.u32 [#allocation10], 4
      %s450 = int_to_ptr.vmem [resolvable:$true] %s449
      %s451 = sshll.u32 %s7, 4
      %s452 = int_to_ptr.hbm [resolvable:$true] %s451
      %457 = dma.vmem_to_hbm [thread:$0]  %s450, 1024, %s452, [#allocation4], 128, 128, 8
    $region49: #{tpu_custom_call.1} parent=1 // pred_fallthru
      _
    // Predicated region
    $region50: #{tpu_custom_call.1} parent=1 // pred_check
      _
    $region51: #{tpu_custom_call.1} parent=1 // pred_check_branch
      %459 = sbr.rel (0) target = $region53
    $region52: #{tpu_custom_call.1} parent=1 // pred_region
      %461 = dma.done [#allocation4], 1024
    $region53: #{tpu_custom_call.1} parent=1 // pred_fallthru
      _
    %462 = vsyncpa [#allocation3], 1
    %463 = vsyncpa [#allocation6], 1
    %464 = vsyncpa [#allocation9], 1
    %465 = vsyncpa [#allocation4], 1

</llo_original>
